<compile_context>
chip_gen: v5e
topology: v5e:2x2
jax: 0.10.0
libtpu: 0.0.40
codegen_flags: <defaults>
</compile_context>

<pallas_src>
import functools

import numpy as np
import jax
import jax.numpy as jnp
from jax.experimental import pallas as pl
from jax.experimental.pallas import tpu as pltpu

MIN_NORM = 1e-15          # manifold.min_norm in the reference PoincareBall
EPS_F32 = 4e-3            # manifold.eps[torch.float32]


def _artanh(y):
    # reference Artanh clamps to (-1 + 1e-15, 1 - 1e-15)
    y = jnp.clip(y, -1.0 + 1e-15, 1.0 - 1e-15)
    return 0.5 * jnp.log((1.0 + y) / (1.0 - y))


# --------------------------- kernel 1: logmap0 ------------------------------
def logmap0_kernel(x_ref, o_ref, *, c):
    sqrt_c = c ** 0.5
    x = x_ref[...].astype(jnp.float32)
    x_norm = jnp.maximum(
        jnp.sqrt(jnp.sum(x * x, axis=-1, keepdims=True)), MIN_NORM)
    scale = _artanh(sqrt_c * x_norm) / (sqrt_c * x_norm)   # exact divide
    o_ref[...] = (scale * x).astype(o_ref.dtype)


# ------------- kernel 2: block-sparse aggregation + expmap0/proj ------------
def hyp_agg_kernel(kmap_ref, cnt_ref, adj_ref, xt_ref, o_ref, acc_ref, *,
                   c, tk, kmax, xt_resident):
    i = pl.program_id(0)
    k = pl.program_id(1)

    @pl.when(k == 0)
    def _():
        acc_ref[...] = jnp.zeros_like(acc_ref)

    # Only accumulate for real (nonzero) adjacency tiles of this row block.
    @pl.when(k < cnt_ref[i])
    def _():
        if xt_resident:
            k_blk = kmap_ref[i * kmax + k]
            start = pl.multiple_of(k_blk * tk, tk)
            xt = xt_ref[pl.ds(start, tk), :]          # bf16 chunk, VMEM resident
        else:
            xt = xt_ref[...]                          # streamed (tk, D) chunk
        acc_ref[...] += jnp.dot(adj_ref[...].astype(jnp.bfloat16), xt,
                                preferred_element_type=jnp.float32)

    # ---- finalize: expmap0 + proj on the accumulated rows ------------------
    @pl.when(k == pl.num_programs(1) - 1)
    def _():
        sqrt_c = c ** 0.5
        u = acc_ref[...]
        u_norm = jnp.maximum(
            jnp.sqrt(jnp.sum(u * u, axis=-1, keepdims=True)), MIN_NORM)
        gamma = jnp.tanh(sqrt_c * u_norm) * (u / (sqrt_c * u_norm))

        g_norm = jnp.maximum(
            jnp.sqrt(jnp.sum(gamma * gamma, axis=-1, keepdims=True)), MIN_NORM)
        maxnorm = (1.0 - EPS_F32) / sqrt_c
        projected = gamma / g_norm * maxnorm          # exact divide (stay on ball)
        o_ref[...] = jnp.where(g_norm > maxnorm, projected,
                               gamma).astype(o_ref.dtype)


# ------------------------ host-side block schedule --------------------------
def build_block_schedule(adj_host, tm, tk):
    """Per-row-block list of nonzero (tm, tk) adjacency tiles.

    adj structure is static across layers/steps in practice: compute once and
    pass it back to hyp_agg(..., block_schedule=...) to avoid recomputation and
    the device->host transfer.
    """
    adj_host = np.asarray(adj_host)
    n = adj_host.shape[0]
    ni, nk = n // tm, n // tk
    blocks = adj_host.reshape(ni, tm, nk, tk)
    nz = np.abs(blocks).max(axis=(1, 3)) > 0.0               # (ni, nk) bool
    counts = np.maximum(nz.sum(axis=1), 1).astype(np.int32)  # >=1 per row block
    kmax = int(counts.max())
    kmap = np.zeros((ni, kmax), np.int32)
    for i in range(ni):
        ks = np.nonzero(nz[i])[0]
        if ks.size:
            kmap[i, :ks.size] = ks
            kmap[i, ks.size:] = ks[-1]   # repeat last -> duplicate DMA is skipped
    return jnp.asarray(kmap.reshape(-1)), jnp.asarray(counts), kmax


# -------------------------------- wrapper -----------------------------------
def hyp_agg(x, adj, c=1.0, *, tm=1024, tk=1024, block_schedule=None):
    """Pallas implementation of HypAgg.forward (Poincare ball, curvature c)."""
    N, D = x.shape
    assert adj.shape == (N, N)

    tm = min(tm, N)
    tk = min(tk, N)
    # Prefer >= 2 row blocks so the 'parallel' axis can shard across the two
    # TensorCores on v7x.
    if N // tm < 2 and tm % 2 == 0 and (tm // 2) % 8 == 0:
        tm //= 2
    assert N % tm == 0 and N % tk == 0, "N must be divisible by tile sizes"
    assert tm % 8 == 0 or tm == N
    assert tk % 128 == 0 or tk == N

    nI = N // tm

    # ---- step 1: x_tangent = logmap0(x, c), once over x, stored in bf16 ----
    x_tan = pl.pallas_call(
        functools.partial(logmap0_kernel, c=float(c)),
        out_shape=jax.ShapeDtypeStruct((N, D), jnp.bfloat16),
        grid_spec=pltpu.PrefetchScalarGridSpec(
            num_scalar_prefetch=0,
            grid=(N // tk,),
            in_specs=[pl.BlockSpec((tk, D), lambda r: (r, 0))],
            out_specs=pl.BlockSpec((tk, D), lambda r: (r, 0)),
        ),
        compiler_params=pltpu.CompilerParams(
            dimension_semantics=("parallel",)),
    )(x)

    # ---- step 2: block-sparse adj @ x_tan on the MXU + expmap0/proj --------
    if block_schedule is None:
        # NOTE: pulls adj to the host once; cache the schedule across calls.
        block_schedule = build_block_schedule(adj, tm, tk)
    kmap_arr, cnt_arr, KMAX = block_schedule

    # Keep x_tan fully VMEM-resident when it is small enough.
    xt_bytes = N * D * 2
    xt_resident = xt_bytes <= (4 << 20)

    # VMEM footprint (double-buffered inputs/outputs + f32 accumulator).
    vmem_bytes = (2 * tm * tk * adj.dtype.itemsize
                  + 2 * (xt_bytes if xt_resident else tk * D * 2)
                  + 2 * tm * D * x.dtype.itemsize
                  + tm * D * 4)
    vmem_limit = int(min(max(int(1.5 * vmem_bytes) + (2 << 20), 32 << 20),
                         64 << 20))

    if xt_resident:
        xt_spec = pl.BlockSpec((N, D), lambda i, k, kmap, cnt: (0, 0))
    else:
        xt_spec = pl.BlockSpec(
            (tk, D), lambda i, k, kmap, cnt: (kmap[i * KMAX + k], 0))

    kernel = functools.partial(hyp_agg_kernel, c=float(c), tk=tk, kmax=KMAX,
                               xt_resident=xt_resident)
    return pl.pallas_call(
        kernel,
        out_shape=jax.ShapeDtypeStruct((N, D), x.dtype),
        grid_spec=pltpu.PrefetchScalarGridSpec(
            num_scalar_prefetch=2,
            grid=(nI, KMAX),
            in_specs=[
                # adj tile picked by the nonzero-tile schedule (f32/bf16 as stored)
                pl.BlockSpec((tm, tk),
                             lambda i, k, kmap, cnt: (i, kmap[i * KMAX + k])),
                xt_spec,
            ],
            out_specs=pl.BlockSpec((tm, D), lambda i, k, kmap, cnt: (i, 0)),
            scratch_shapes=[pltpu.VMEM((tm, D), jnp.float32)],
        ),
        compiler_params=pltpu.CompilerParams(
            dimension_semantics=("parallel", "arbitrary"),
            vmem_limit_bytes=vmem_limit),
    )(kmap_arr, cnt_arr, adj, x_tan)


# ---------------- pure-JAX reference (for a correctness check) --------------
def _ref_hyp_agg(x, adj, c=1.0):
    sqrt_c = c ** 0.5
    x = x.astype(jnp.float32)
    x_norm = jnp.maximum(jnp.linalg.norm(x, axis=-1, keepdims=True), MIN_NORM)
    x_tan = _artanh(sqrt_c * x_norm) / (sqrt_c * x_norm) * x
    u = adj.astype(jnp.float32) @ x_tan
    u_norm = jnp.maximum(jnp.linalg.norm(u, axis=-1, keepdims=True), MIN_NORM)
    gamma = jnp.tanh(sqrt_c * u_norm) * u / (sqrt_c * u_norm)
    g_norm = jnp.maximum(jnp.linalg.norm(gamma, axis=-1, keepdims=True), MIN_NORM)
    maxnorm = (1.0 - EPS_F32) / sqrt_c
    return jnp.where(g_norm > maxnorm, gamma / g_norm * maxnorm, gamma)


if __name__ == "__main__":
    # Small, tile-aligned demo shapes: N nodes x D features, block-sparse adj.
    N, D = 512, 128
    tm, tk = 128, 128
    c = 1.0

    key = jax.random.PRNGKey(0)
    kx, kr, ka, kb = jax.random.split(key, 4)

    # points on the Poincare ball: random directions with radii < 1/sqrt(c)
    raw = jax.random.normal(kx, (N, D), jnp.float32)
    raw = raw / jnp.linalg.norm(raw, axis=-1, keepdims=True)
    radii = jax.random.uniform(kr, (N, 1), minval=0.05, maxval=0.8)
    x = raw * radii

    # block-structured sparse adjacency (spmm in the reference): some (tm, tk)
    # tiles are exactly zero so the scalar-prefetch skip path is exercised.
    nI, nK = N // tm, N // tk
    blk = jax.random.uniform(kb, (nI, nK)) < 0.4
    blk = blk | jnp.eye(nI, dtype=bool)                   # keep diagonal blocks
    mask = jnp.repeat(jnp.repeat(blk, tm, axis=0), tk, axis=1)
    a = jax.random.uniform(ka, (N, N), jnp.float32)
    a = jnp.where((a > 0.7) & mask, a, 0.0)               # sparsify inside blocks
    a = a + jnp.eye(N, dtype=jnp.float32)                 # self loops
    adj = a / jnp.sum(a, axis=-1, keepdims=True)          # row normalize

    out = jax.block_until_ready(hyp_agg(x, adj, c=c, tm=tm, tk=tk))
    ref = _ref_hyp_agg(x, adj, c=c)

    assert out.shape == (N, D)
    # bf16 adj tiles / x_tangent on the MXU (f32 accumulation): loosened tol.
    err = float(jnp.max(jnp.abs(out - ref)))
    assert jnp.allclose(out, ref, rtol=2e-2, atol=2e-2), err
    print("KERNEL_OK")
</pallas_src>

<mosaic_0001>
module attributes {stable_mosaic.version = 11 : i64} {
  func.func @logmap0_kernel(%arg0: i32, %arg1: memref<128x128xf32, #tpu.memory_space<vmem>>, %arg2: memref<128x128xbf16, #tpu.memory_space<vmem>>) attributes {dimension_semantics = [#tpu.dimension_semantics<parallel>], iteration_bounds = array<i64: 4>, scalar_prefetch = 0 : i64, scratch_operands = 0 : i64, tpu.core_type = #tpu.core_type<tc>, window_params = [{transform_indices = @transform_0, window_bounds = array<i64: 128, 128>}, {transform_indices = @transform_1, window_bounds = array<i64: 128, 128>}]} {
    %c0 = arith.constant 0 : index
    %c0_0 = arith.constant 0 : index
    %0 = vector.load %arg1[%c0, %c0_0] : memref<128x128xf32, #tpu.memory_space<vmem>>, vector<128x128xf32>
    %1 = arith.mulf %0, %0 : vector<128x128xf32>
    %cst = arith.constant dense<0.000000e+00> : vector<128xf32>
    %2 = vector.multi_reduction <add>, %1, %cst [1] : vector<128x128xf32> to vector<128xf32>
    %3 = vector.shape_cast %2 : vector<128xf32> to vector<128x1xf32>
    %4 = math.sqrt %3 : vector<128x1xf32>
    %cst_1 = arith.constant 1.000000e-15 : f32
    %5 = vector.broadcast %cst_1 : f32 to vector<128x1xf32>
    %6 = arith.maximumf %4, %5 : vector<128x1xf32>
    %cst_2 = arith.constant 1.000000e+00 : f32
    %7 = vector.broadcast %cst_2 : f32 to vector<128x1xf32>
    %8 = arith.mulf %7, %6 : vector<128x1xf32>
    %cst_3 = arith.constant -1.000000e+00 : f32
    %cst_4 = arith.constant 1.000000e+00 : f32
    %9 = vector.broadcast %cst_3 : f32 to vector<128x1xf32>
    %10 = arith.maximumf %9, %8 : vector<128x1xf32>
    %11 = vector.broadcast %cst_4 : f32 to vector<128x1xf32>
    %12 = arith.minimumf %11, %10 : vector<128x1xf32>
    %cst_5 = arith.constant 1.000000e+00 : f32
    %13 = vector.broadcast %cst_5 : f32 to vector<128x1xf32>
    %14 = arith.addf %13, %12 : vector<128x1xf32>
    %cst_6 = arith.constant 1.000000e+00 : f32
    %15 = vector.broadcast %cst_6 : f32 to vector<128x1xf32>
    %16 = arith.subf %15, %12 : vector<128x1xf32>
    %17 = arith.divf %14, %16 : vector<128x1xf32>
    %18 = math.log %17 : vector<128x1xf32>
    %cst_7 = arith.constant 5.000000e-01 : f32
    %19 = vector.broadcast %cst_7 : f32 to vector<128x1xf32>
    %20 = arith.mulf %19, %18 : vector<128x1xf32>
    %cst_8 = arith.constant 1.000000e+00 : f32
    %21 = vector.broadcast %cst_8 : f32 to vector<128x1xf32>
    %22 = arith.mulf %21, %6 : vector<128x1xf32>
    %23 = arith.divf %20, %22 : vector<128x1xf32>
    %24 = vector.broadcast %23 : vector<128x1xf32> to vector<128x128xf32>
    %25 = arith.mulf %24, %0 : vector<128x128xf32>
    %26 = arith.truncf %25 : vector<128x128xf32> to vector<128x128xbf16>
    %c0_9 = arith.constant 0 : index
    %c0_10 = arith.constant 0 : index
    %27 = vector.load %arg2[%c0_9, %c0_10] : memref<128x128xbf16, #tpu.memory_space<vmem>>, vector<128x128xbf16>
    tpu.vector_store %arg2[%c0_9, %c0_10], %26 {strides = array<i32>} : memref<128x128xbf16, #tpu.memory_space<vmem>>, vector<128x128xbf16>,
    return
  }
  func.func @transform_0(%arg0: i32) -> (i32, i32) {
    %c0_i32 = arith.constant 0 : i32
    %c0_i32_0 = arith.constant 0 : i32
    return %arg0, %c0_i32 : i32, i32
  }
  func.func @transform_1(%arg0: i32) -> (i32, i32) {
    %c0_i32 = arith.constant 0 : i32
    %c0_i32_0 = arith.constant 0 : i32
    return %arg0, %c0_i32 : i32, i32
  }
}

</mosaic_0001>

<llo_original>
// kernel: tpu_custom_call.1
$region0: #{tpu_custom_call.1}
  #allocation0 [shape = 'u32[]', space=smem, size = 0x4, offset = 0x4, fixed_abs, tag = 'smem constant byte address 0x4 - core index']
  #allocation1 [shape = 'u32[72,128]{1,0:T(1,128)}', space=vmem, size = 0x9000, scoped, tag = 'internal scratch']
  %s0 = inlined_call_operand.hbm [shape: f32[512,128], index: 0, kind: input, shape index: {}]
  %s1 = inlined_call_operand.hbm [shape: bf16[512,128], index: 1, kind: output, shape index: {}]
  %s2 = sld [smem:[#allocation0]]
  $region41: #{tpu_custom_call.1} parent=0
    _
  %s4 = ssub.s32 1, %s2
  %s5 = scalar_select 0, %s4, %s2
  $region1: #{tpu_custom_call.1} parent=0
    #allocation2 [shape = 'u8[131072]{0}', space=vmem, size = 0x20000, scoped, tag = 'input window, operand 0']
    #allocation3 [shape = 's32[2]{0}', space=sflag, size = 0x8, scoped, tag = 'scoped memory for tpu_custom_call.1']
    #allocation4 [shape = 's32[2]{0}', space=sflag, size = 0x8, scoped, tag = 'scoped memory for tpu_custom_call.1']
    #allocation5 [shape = 'u8[65536]{0}', space=vmem, size = 0x10000, scoped, tag = 'output window, operand 0']
    %6 = vsyncpa [#allocation3], 0
    %s7 = scalar_lea.sflag [#allocation3], 1
    %8 = vsyncpa %s7, 0
    %9 = vsyncpa [#allocation4], 0
    %s10 = scalar_lea.sflag [#allocation4], 1
    %11 = vsyncpa %s10, 0
    loop: start=0, step=1, limit=6
    $region2: #{tpu_custom_call.1} parent=1 // loop_pre_header
      _
    $region3: #{tpu_custom_call.1} parent=1 // loop_header
      %s13 = sphi 0, %s17
      %p14 = scmp.ge.s32.totalorder %s13, 6
      %s23 = sphi 0, %s25
      %s26 = sphi 0, %s23
      %s27 = sphi 0, %s26
      %s43 = sphi 0, %s27
      %s49 = sphi 0, %s51
      %s52 = sphi 0, %s49
      %s53 = sphi 0, %s52
      %s69 = sphi 0, %s53
    $region4: #{tpu_custom_call.1} parent=1 // loop_header_branch
      %16 = sbr.rel (%p14) target = $region8
    $region5: #{tpu_custom_call.1} parent=1 // loop_body
      %s18 = ssub.s32 %s13, 1
      %s19 = ssub.s32 %s13, 2
      %s20 = sadd.s32 %s13, 1
      %s21 = ssub.s32 %s13, %s20
      %p22 = scmp.eq.s32.totalorder %s21, 0
      %s24 = sadd.s32 %s23, 1
      %s25 = scalar_select %p22, %s23, %s24
      %p28 = pneg %p22
      %p29 = scmp.eq.s32.totalorder %s13, 3
      %p30 = por %p28, %p29
      %p31 = scmp.ne.s32.totalorder %s23, %s26
      %p32 = scmp.eq.s32.totalorder %s13, 0
      %p33 = por %p31, %p32
      %p34 = scmp.ne.s32.totalorder %s23, %s26
      %p35 = scmp.eq.s32.totalorder %s18, 3
      %p36 = por %p34, %p35
      %p37 = scmp.ne.s32.totalorder %s26, %s27
      %p38 = scmp.eq.s32.totalorder %s18, 0
      %p39 = por %p37, %p38
      %p40 = scmp.ne.s32.totalorder %s26, %s27
      %p41 = scmp.eq.s32.totalorder %s19, 3
      %p42 = por %p40, %p41
      %p44 = scmp.ne.s32.totalorder %s27, %s43
      %p45 = scmp.eq.s32.totalorder %s19, 0
      %p46 = por %p44, %p45
      %s47 = ssub.s32 %s13, %s20
      %p48 = scmp.eq.s32.totalorder %s47, 0
      %s50 = sadd.s32 %s49, 1
      %s51 = scalar_select %p48, %s49, %s50
      %p54 = pneg %p48
      %p55 = scmp.eq.s32.totalorder %s13, 3
      %p56 = por %p54, %p55
      %p57 = scmp.ne.s32.totalorder %s49, %s52
      %p58 = scmp.eq.s32.totalorder %s13, 0
      %p59 = por %p57, %p58
      %p60 = scmp.ne.s32.totalorder %s49, %s52
      %p61 = scmp.eq.s32.totalorder %s18, 3
      %p62 = por %p60, %p61
      %p63 = scmp.ne.s32.totalorder %s52, %s53
      %p64 = scmp.eq.s32.totalorder %s18, 0
      %p65 = por %p63, %p64
      %p66 = scmp.ne.s32.totalorder %s52, %s53
      %p67 = scmp.eq.s32.totalorder %s19, 3
      %p68 = por %p66, %p67
      %p70 = scmp.ne.s32.totalorder %s53, %s69
      %p71 = scmp.eq.s32.totalorder %s19, 0
      %p72 = por %p70, %p71
      %p73 = scmp.le.s32.totalorder 1, %s13
      %p74 = scmp.lt.s32.totalorder %s13, 5
      %p75 = pnand %p73, %p74
      %p76 = pneg %p75
      // Predicated region
      $region9: #{tpu_custom_call.1} parent=5 // pred_check
        _
      $region10: #{tpu_custom_call.1} parent=5 // pred_check_branch
        %78 = sbr.rel (%p75) target = $region12
      $region11: #{tpu_custom_call.1} parent=5 // pred_region
        %s79 = ssub.s32 %s13, 1
      $region12: #{tpu_custom_call.1} parent=5 // pred_fallthru
        _
      %p80 = scmp.lt.s32.totalorder %s13, 4
      // Predicated region
      $region13: #{tpu_custom_call.1} parent=5 // pred_check
        %p81 = pneg %p80
      $region14: #{tpu_custom_call.1} parent=5 // pred_check_branch
        %83 = sbr.rel (%p81) target = $region16
      $region15: #{tpu_custom_call.1} parent=5 // pred_region
        // Predicated region
        $region17: #{tpu_custom_call.1} parent=15 // pred_check
          %p84 = pneg %p33
        $region18: #{tpu_custom_call.1} parent=15 // pred_check_branch
          %86 = sbr.rel (%p84) target = $region20
        $region19: #{tpu_custom_call.1} parent=15 // pred_region
          %s87 = sand.u32 %s23, 1
          %s88 = scalar_lea.sflag [#allocation3], %s87
          %s89 = sand.u32 %s23, 1
          %s90 = smul.addr %s89, 128
          %s91 = scalar_lea.vmem [#allocation2], %s90
          %s92 = smul.u32 16, %s13
          %94 = vsyncadd %s88, 0
          %s95 = smul.addr %s92, 8
          %s96 = scalar_lea.hbm %s0, %s95
          %s97 = sshll.u32 %s96, 4
          %s98 = int_to_ptr.hbm [resolvable:$true] %s97
          %s99 = sshll.u32 %s91, 4
          %s100 = int_to_ptr.vmem [resolvable:$true] %s99
          %105 = dma.hbm_to_vmem [thread:$0]  %s98, 2048, %s100, %s88, 128, 128, 8
        $region20: #{tpu_custom_call.1} parent=15 // pred_fallthru
          _
      $region16: #{tpu_custom_call.1} parent=5 // pred_fallthru
        _
      %p106 = scmp.le.s32.totalorder 1, %s13
      %p107 = scmp.lt.s32.totalorder %s13, 5
      %p108 = pnand %p106, %p107
      %p109 = pneg %p108
      // Predicated region
      $region21: #{tpu_custom_call.1} parent=5 // pred_check
        _
      $region22: #{tpu_custom_call.1} parent=5 // pred_check_branch
        %111 = sbr.rel (%p108) target = $region24
      $region23: #{tpu_custom_call.1} parent=5 // pred_region
        %s112 = ssub.s32 %s13, 1
        %s113 = sand.u32 %s26, 1
        %s114 = scalar_lea.sflag [#allocation3], %s113
        %s115 = sand.u32 %s26, 1
        %s116 = smul.addr %s115, 128
        %s117 = scalar_lea.vmem [#allocation2], %s116
        // Predicated region
        $region25: #{tpu_custom_call.1} parent=23 // pred_check
          %p118 = pneg %p39
        $region26: #{tpu_custom_call.1} parent=23 // pred_check_branch
          %120 = sbr.rel (%p118) target = $region28
        $region27: #{tpu_custom_call.1} parent=23 // pred_region
          %122 = dma.done %s114, 2048
        $region28: #{tpu_custom_call.1} parent=23 // pred_fallthru
          _
        %s123 = sand.u32 %s26, 1
        %s124 = scalar_lea.sflag [#allocation3], %s123
        %s125 = sand.u32 %s26, 1
        %s126 = smul.addr %s125, 128
        %s127 = scalar_lea.vmem [#allocation2], %s126
        %p128 = pneg %p39
        %p129 = pneg %p36
        %p130 = pneg %p65
        %p131 = pneg %p62
        %s132 = sand.u32 %s52, 1
        %s133 = scalar_lea.sflag [#allocation4], %s132
        %s134 = sand.u32 %s52, 1
        %s135 = smul.addr %s134, 64
        %s136 = scalar_lea.vmem [#allocation5], %s135
        %s137 = smul.u32 16, %s18
        %s138 = smul.u32 16, %s18
        %v139 = vld [vmem:[%s117] sm:$0xff]
        %v140 = vld [vmem:[%s117 + $0x8] sm:$0xff]
        %v141 = vld [vmem:[%s117 + $0x10] sm:$0xff]
        %v142 = vld [vmem:[%s117 + $0x18] sm:$0xff]
        %v143 = vld [vmem:[%s117 + $0x20] sm:$0xff]
        %v144 = vld [vmem:[%s117 + $0x28] sm:$0xff]
        %v145 = vld [vmem:[%s117 + $0x30] sm:$0xff]
        %v146 = vld [vmem:[%s117 + $0x38] sm:$0xff]
        %v147 = vld [vmem:[%s117 + $0x40] sm:$0xff]
        %v148 = vld [vmem:[%s117 + $0x48] sm:$0xff]
        %v149 = vld [vmem:[%s117 + $0x50] sm:$0xff]
        %v150 = vld [vmem:[%s117 + $0x58] sm:$0xff]
        %v151 = vld [vmem:[%s117 + $0x60] sm:$0xff]
        %v152 = vld [vmem:[%s117 + $0x68] sm:$0xff]
        %v153 = vld [vmem:[%s117 + $0x70] sm:$0xff]
        %v154 = vld [vmem:[%s117 + $0x78] sm:$0xff]
        %v155 = vmul.f32 %v139, %v139
        %v156 = vmul.f32 %v140, %v140
        %v157 = vmul.f32 %v141, %v141
        %v158 = vmul.f32 %v142, %v142
        %v159 = vmul.f32 %v143, %v143
        %v160 = vmul.f32 %v144, %v144
        %v161 = vmul.f32 %v145, %v145
        %v162 = vmul.f32 %v146, %v146
        %v163 = vmul.f32 %v147, %v147
        %v164 = vmul.f32 %v148, %v148
        %v165 = vmul.f32 %v149, %v149
        %v166 = vmul.f32 %v150, %v150
        %v167 = vmul.f32 %v151, %v151
        %v168 = vmul.f32 %v152, %v152
        %v169 = vmul.f32 %v153, %v153
        %v170 = vmul.f32 %v154, %v154
        %171 = vadd.xlane.f32.xlu0 %v155
        %v172 = vpop.xlane.xlu0 %171
        %173 = vadd.xlane.f32.xlu0 %v156
        %v174 = vpop.xlane.xlu0 %173
        %175 = vadd.xlane.f32.xlu0 %v157
        %v176 = vpop.xlane.xlu0 %175
        %177 = vadd.xlane.f32.xlu0 %v158
        %v178 = vpop.xlane.xlu0 %177
        %179 = vadd.xlane.f32.xlu0 %v159
        %v180 = vpop.xlane.xlu0 %179
        %181 = vadd.xlane.f32.xlu0 %v160
        %v182 = vpop.xlane.xlu0 %181
        %183 = vadd.xlane.f32.xlu0 %v161
        %v184 = vpop.xlane.xlu0 %183
        %185 = vadd.xlane.f32.xlu0 %v162
        %v186 = vpop.xlane.xlu0 %185
        %187 = vadd.xlane.f32.xlu0 %v163
        %v188 = vpop.xlane.xlu0 %187
        %189 = vadd.xlane.f32.xlu0 %v164
        %v190 = vpop.xlane.xlu0 %189
        %191 = vadd.xlane.f32.xlu0 %v165
        %v192 = vpop.xlane.xlu0 %191
        %193 = vadd.xlane.f32.xlu0 %v166
        %v194 = vpop.xlane.xlu0 %193
        %195 = vadd.xlane.f32.xlu0 %v167
        %v196 = vpop.xlane.xlu0 %195
        %197 = vadd.xlane.f32.xlu0 %v168
        %v198 = vpop.xlane.xlu0 %197
        %199 = vadd.xlane.f32.xlu0 %v169
        %v200 = vpop.xlane.xlu0 %199
        %201 = vadd.xlane.f32.xlu0 %v170
        %v202 = vpop.xlane.xlu0 %201
        %v203 = vrsqrt.pop %v172
        %v204 = vmul.f32 %v203, %v172
        %v205 = vmul.f32 %v204, %v203
        %v206 = vmul.f32 0.5, %v205
        %v207 = vsub.f32 1.5, %v206
        %v208 = vmul.f32 %v203, %v207
        %v209 = vmul.f32 %v172, %v208
        %vm210 = vcmp.eq.f32.partialorder %v172, inf
        %v211 = vsel %vm210, %v172, %v209
        %vm212 = vcmp.eq.f32.partialorder %v172, 0.0
        %v213 = vand.u32 %v172, 2147483648
        %v214 = vsel %vm212, %v213, %v211
        %v215 = vrsqrt.pop %v174
        %v216 = vmul.f32 %v215, %v174
        %v217 = vmul.f32 %v216, %v215
        %v218 = vmul.f32 0.5, %v217
        %v219 = vsub.f32 1.5, %v218
        %v220 = vmul.f32 %v215, %v219
        %v221 = vmul.f32 %v174, %v220
        %vm222 = vcmp.eq.f32.partialorder %v174, inf
        %v223 = vsel %vm222, %v174, %v221
        %vm224 = vcmp.eq.f32.partialorder %v174, 0.0
        %v225 = vand.u32 %v174, 2147483648
        %v226 = vsel %vm224, %v225, %v223
        %v227 = vrsqrt.pop %v176
        %v228 = vmul.f32 %v227, %v176
        %v229 = vmul.f32 %v228, %v227
        %v230 = vmul.f32 0.5, %v229
        %v231 = vsub.f32 1.5, %v230
        %v232 = vmul.f32 %v227, %v231
        %v233 = vmul.f32 %v176, %v232
        %vm234 = vcmp.eq.f32.partialorder %v176, inf
        %v235 = vsel %vm234, %v176, %v233
        %vm236 = vcmp.eq.f32.partialorder %v176, 0.0
        %v237 = vand.u32 %v176, 2147483648
        %v238 = vsel %vm236, %v237, %v235
        %v239 = vrsqrt.pop %v178
        %v240 = vmul.f32 %v239, %v178
        %v241 = vmul.f32 %v240, %v239
        %v242 = vmul.f32 0.5, %v241
        %v243 = vsub.f32 1.5, %v242
        %v244 = vmul.f32 %v239, %v243
        %v245 = vmul.f32 %v178, %v244
        %vm246 = vcmp.eq.f32.partialorder %v178, inf
        %v247 = vsel %vm246, %v178, %v245
        %vm248 = vcmp.eq.f32.partialorder %v178, 0.0
        %v249 = vand.u32 %v178, 2147483648
        %v250 = vsel %vm248, %v249, %v247
        %v251 = vrsqrt.pop %v180
        %v252 = vmul.f32 %v251, %v180
        %v253 = vmul.f32 %v252, %v251
        %v254 = vmul.f32 0.5, %v253
        %v255 = vsub.f32 1.5, %v254
        %v256 = vmul.f32 %v251, %v255
        %v257 = vmul.f32 %v180, %v256
        %vm258 = vcmp.eq.f32.partialorder %v180, inf
        %v259 = vsel %vm258, %v180, %v257
        %vm260 = vcmp.eq.f32.partialorder %v180, 0.0
        %v261 = vand.u32 %v180, 2147483648
        %v262 = vsel %vm260, %v261, %v259
        %v263 = vrsqrt.pop %v182
        %v264 = vmul.f32 %v263, %v182
        %v265 = vmul.f32 %v264, %v263
        %v266 = vmul.f32 0.5, %v265
        %v267 = vsub.f32 1.5, %v266
        %v268 = vmul.f32 %v263, %v267
        %v269 = vmul.f32 %v182, %v268
        %vm270 = vcmp.eq.f32.partialorder %v182, inf
        %v271 = vsel %vm270, %v182, %v269
        %vm272 = vcmp.eq.f32.partialorder %v182, 0.0
        %v273 = vand.u32 %v182, 2147483648
        %v274 = vsel %vm272, %v273, %v271
        %v275 = vrsqrt.pop %v184
        %v276 = vmul.f32 %v275, %v184
        %v277 = vmul.f32 %v276, %v275
        %v278 = vmul.f32 0.5, %v277
        %v279 = vsub.f32 1.5, %v278
        %v280 = vmul.f32 %v275, %v279
        %v281 = vmul.f32 %v184, %v280
        %vm282 = vcmp.eq.f32.partialorder %v184, inf
        %v283 = vsel %vm282, %v184, %v281
        %vm284 = vcmp.eq.f32.partialorder %v184, 0.0
        %v285 = vand.u32 %v184, 2147483648
        %v286 = vsel %vm284, %v285, %v283
        %v287 = vrsqrt.pop %v186
        %v288 = vmul.f32 %v287, %v186
        %v289 = vmul.f32 %v288, %v287
        %v290 = vmul.f32 0.5, %v289
        %v291 = vsub.f32 1.5, %v290
        %v292 = vmul.f32 %v287, %v291
        %v293 = vmul.f32 %v186, %v292
        %vm294 = vcmp.eq.f32.partialorder %v186, inf
        %v295 = vsel %vm294, %v186, %v293
        %vm296 = vcmp.eq.f32.partialorder %v186, 0.0
        %v297 = vand.u32 %v186, 2147483648
        %v298 = vsel %vm296, %v297, %v295
        %v299 = vrsqrt.pop %v188
        %v300 = vmul.f32 %v299, %v188
        %v301 = vmul.f32 %v300, %v299
        %v302 = vmul.f32 0.5, %v301
        %v303 = vsub.f32 1.5, %v302
        %v304 = vmul.f32 %v299, %v303
        %v305 = vmul.f32 %v188, %v304
        %vm306 = vcmp.eq.f32.partialorder %v188, inf
        %v307 = vsel %vm306, %v188, %v305
        %vm308 = vcmp.eq.f32.partialorder %v188, 0.0
        %v309 = vand.u32 %v188, 2147483648
        %v310 = vsel %vm308, %v309, %v307
        %v311 = vrsqrt.pop %v190
        %v312 = vmul.f32 %v311, %v190
        %v313 = vmul.f32 %v312, %v311
        %v314 = vmul.f32 0.5, %v313
        %v315 = vsub.f32 1.5, %v314
        %v316 = vmul.f32 %v311, %v315
        %v317 = vmul.f32 %v190, %v316
        %vm318 = vcmp.eq.f32.partialorder %v190, inf
        %v319 = vsel %vm318, %v190, %v317
        %vm320 = vcmp.eq.f32.partialorder %v190, 0.0
        %v321 = vand.u32 %v190, 2147483648
        %v322 = vsel %vm320, %v321, %v319
        %v323 = vrsqrt.pop %v192
        %v324 = vmul.f32 %v323, %v192
        %v325 = vmul.f32 %v324, %v323
        %v326 = vmul.f32 0.5, %v325
        %v327 = vsub.f32 1.5, %v326
        %v328 = vmul.f32 %v323, %v327
        %v329 = vmul.f32 %v192, %v328
        %vm330 = vcmp.eq.f32.partialorder %v192, inf
        %v331 = vsel %vm330, %v192, %v329
        %vm332 = vcmp.eq.f32.partialorder %v192, 0.0
        %v333 = vand.u32 %v192, 2147483648
        %v334 = vsel %vm332, %v333, %v331
        %v335 = vrsqrt.pop %v194
        %v336 = vmul.f32 %v335, %v194
        %v337 = vmul.f32 %v336, %v335
        %v338 = vmul.f32 0.5, %v337
        %v339 = vsub.f32 1.5, %v338
        %v340 = vmul.f32 %v335, %v339
        %v341 = vmul.f32 %v194, %v340
        %vm342 = vcmp.eq.f32.partialorder %v194, inf
        %v343 = vsel %vm342, %v194, %v341
        %vm344 = vcmp.eq.f32.partialorder %v194, 0.0
        %v345 = vand.u32 %v194, 2147483648
        %v346 = vsel %vm344, %v345, %v343
        %v347 = vrsqrt.pop %v196
        %v348 = vmul.f32 %v347, %v196
        %v349 = vmul.f32 %v348, %v347
        %v350 = vmul.f32 0.5, %v349
        %v351 = vsub.f32 1.5, %v350
        %v352 = vmul.f32 %v347, %v351
        %v353 = vmul.f32 %v196, %v352
        %vm354 = vcmp.eq.f32.partialorder %v196, inf
        %v355 = vsel %vm354, %v196, %v353
        %vm356 = vcmp.eq.f32.partialorder %v196, 0.0
        %v357 = vand.u32 %v196, 2147483648
        %v358 = vsel %vm356, %v357, %v355
        %v359 = vrsqrt.pop %v198
        %v360 = vmul.f32 %v359, %v198
        %v361 = vmul.f32 %v360, %v359
        %v362 = vmul.f32 0.5, %v361
        %v363 = vsub.f32 1.5, %v362
        %v364 = vmul.f32 %v359, %v363
        %v365 = vmul.f32 %v198, %v364
        %vm366 = vcmp.eq.f32.partialorder %v198, inf
        %v367 = vsel %vm366, %v198, %v365
        %vm368 = vcmp.eq.f32.partialorder %v198, 0.0
        %v369 = vand.u32 %v198, 2147483648
        %v370 = vsel %vm368, %v369, %v367
        %v371 = vrsqrt.pop %v200
        %v372 = vmul.f32 %v371, %v200
        %v373 = vmul.f32 %v372, %v371
        %v374 = vmul.f32 0.5, %v373
        %v375 = vsub.f32 1.5, %v374
        %v376 = vmul.f32 %v371, %v375
        %v377 = vmul.f32 %v200, %v376
        %vm378 = vcmp.eq.f32.partialorder %v200, inf
        %v379 = vsel %vm378, %v200, %v377
        %vm380 = vcmp.eq.f32.partialorder %v200, 0.0
        %v381 = vand.u32 %v200, 2147483648
        %v382 = vsel %vm380, %v381, %v379
        %v383 = vrsqrt.pop %v202
        %v384 = vmul.f32 %v383, %v202
        %v385 = vmul.f32 %v384, %v383
        %v386 = vmul.f32 0.5, %v385
        %v387 = vsub.f32 1.5, %v386
        %v388 = vmul.f32 %v383, %v387
        %v389 = vmul.f32 %v202, %v388
        %vm390 = vcmp.eq.f32.partialorder %v202, inf
        %v391 = vsel %vm390, %v202, %v389
        %vm392 = vcmp.eq.f32.partialorder %v202, 0.0
        %v393 = vand.u32 %v202, 2147483648
        %v394 = vsel %vm392, %v393, %v391
        %v395 = vmax.f32 %v214, 1e-15
        %v396 = vmax.f32 %v226, 1e-15
        %v397 = vmax.f32 %v238, 1e-15
        %v398 = vmax.f32 %v250, 1e-15
        %v399 = vmax.f32 %v262, 1e-15
        %v400 = vmax.f32 %v274, 1e-15
        %v401 = vmax.f32 %v286, 1e-15
        %v402 = vmax.f32 %v298, 1e-15
        %v403 = vmax.f32 %v310, 1e-15
        %v404 = vmax.f32 %v322, 1e-15
        %v405 = vmax.f32 %v334, 1e-15
        %v406 = vmax.f32 %v346, 1e-15
        %v407 = vmax.f32 %v358, 1e-15
        %v408 = vmax.f32 %v370, 1e-15
        %v409 = vmax.f32 %v382, 1e-15
        %v410 = vmax.f32 %v394, 1e-15
        %v411 = vmax.f32 %v395, -1.0
        %v412 = vmax.f32 %v396, -1.0
        %v413 = vmax.f32 %v397, -1.0
        %v414 = vmax.f32 %v398, -1.0
        %v415 = vmax.f32 %v399, -1.0
        %v416 = vmax.f32 %v400, -1.0
        %v417 = vmax.f32 %v401, -1.0
        %v418 = vmax.f32 %v402, -1.0
        %v419 = vmax.f32 %v403, -1.0
        %v420 = vmax.f32 %v404, -1.0
        %v421 = vmax.f32 %v405, -1.0
        %v422 = vmax.f32 %v406, -1.0
        %v423 = vmax.f32 %v407, -1.0
        %v424 = vmax.f32 %v408, -1.0
        %v425 = vmax.f32 %v409, -1.0
        %v426 = vmax.f32 %v410, -1.0
        %v427 = vmin.f32 %v411, 1.0
        %v428 = vmin.f32 %v412, 1.0
        %v429 = vmin.f32 %v413, 1.0
        %v430 = vmin.f32 %v414, 1.0
        %v431 = vmin.f32 %v415, 1.0
        %v432 = vmin.f32 %v416, 1.0
        %v433 = vmin.f32 %v417, 1.0
        %v434 = vmin.f32 %v418, 1.0
        %v435 = vmin.f32 %v419, 1.0
        %v436 = vmin.f32 %v420, 1.0
        %v437 = vmin.f32 %v421, 1.0
        %v438 = vmin.f32 %v422, 1.0
        %v439 = vmin.f32 %v423, 1.0
        %v440 = vmin.f32 %v424, 1.0
        %v441 = vmin.f32 %v425, 1.0
        %v442 = vmin.f32 %v426, 1.0
        %v443 = vadd.f32 %v427, 1.0
        %v444 = vadd.f32 %v428, 1.0
        %v445 = vadd.f32 %v429, 1.0
        %v446 = vadd.f32 %v430, 1.0
        %v447 = vadd.f32 %v431, 1.0
        %v448 = vadd.f32 %v432, 1.0
        %v449 = vadd.f32 %v433, 1.0
        %v450 = vadd.f32 %v434, 1.0
        %v451 = vadd.f32 %v435, 1.0
        %v452 = vadd.f32 %v436, 1.0
        %v453 = vadd.f32 %v437, 1.0
        %v454 = vadd.f32 %v438, 1.0
        %v455 = vadd.f32 %v439, 1.0
        %v456 = vadd.f32 %v440, 1.0
        %v457 = vadd.f32 %v441, 1.0
        %v458 = vadd.f32 %v442, 1.0
        %v459 = vsub.f32 1.0, %v427
        %v460 = vsub.f32 1.0, %v428
        %v461 = vsub.f32 1.0, %v429
        %v462 = vsub.f32 1.0, %v430
        %v463 = vsub.f32 1.0, %v431
        %v464 = vsub.f32 1.0, %v432
        %v465 = vsub.f32 1.0, %v433
        %v466 = vsub.f32 1.0, %v434
        %v467 = vsub.f32 1.0, %v435
        %v468 = vsub.f32 1.0, %v436
        %v469 = vsub.f32 1.0, %v437
        %v470 = vsub.f32 1.0, %v438
        %v471 = vsub.f32 1.0, %v439
        %v472 = vsub.f32 1.0, %v440
        %v473 = vsub.f32 1.0, %v441
        %v474 = vsub.f32 1.0, %v442
        %v475 = vrcp.pop %v459
        %v476 = vmul.f32 %v459, %v475
        %v477 = vsub.f32 1.0, %v476
        %v478 = vmul.f32 %v475, %v477
        %v479 = vadd.f32 %v475, %v478
        %vm480 = vweird.f32 %v459
        %vm481 = vweird.f32 %v475
        %vm482 = vmor %vm480, %vm481
        %v483 = vsel %vm482, %v475, %v479
        %v484 = vand.u32 2147483647, %v459
        %vm485 = vcmp.eq.f32.partialorder %v484, 8.507059e+37
        %v486 = vand.u32 %v459, 2147483648
        %v487 = vor.u32 1.1754944e-38, %v486
        %v488 = vsel %vm485, %v487, %v483
        %v489 = vmul.f32 %v443, %v488
        %v490 = vrcp.pop %v460
        %v491 = vmul.f32 %v460, %v490
        %v492 = vsub.f32 1.0, %v491
        %v493 = vmul.f32 %v490, %v492
        %v494 = vadd.f32 %v490, %v493
        %vm495 = vweird.f32 %v460
        %vm496 = vweird.f32 %v490
        %vm497 = vmor %vm495, %vm496
        %v498 = vsel %vm497, %v490, %v494
        %v499 = vand.u32 2147483647, %v460
        %vm500 = vcmp.eq.f32.partialorder %v499, 8.507059e+37
        %v501 = vand.u32 %v460, 2147483648
        %v502 = vor.u32 1.1754944e-38, %v501
        %v503 = vsel %vm500, %v502, %v498
        %v504 = vmul.f32 %v444, %v503
        %v505 = vrcp.pop %v461
        %v506 = vmul.f32 %v461, %v505
        %v507 = vsub.f32 1.0, %v506
        %v508 = vmul.f32 %v505, %v507
        %v509 = vadd.f32 %v505, %v508
        %vm510 = vweird.f32 %v461
        %vm511 = vweird.f32 %v505
        %vm512 = vmor %vm510, %vm511
        %v513 = vsel %vm512, %v505, %v509
        %v514 = vand.u32 2147483647, %v461
        %vm515 = vcmp.eq.f32.partialorder %v514, 8.507059e+37
        %v516 = vand.u32 %v461, 2147483648
        %v517 = vor.u32 1.1754944e-38, %v516
        %v518 = vsel %vm515, %v517, %v513
        %v519 = vmul.f32 %v445, %v518
        %v520 = vrcp.pop %v462
        %v521 = vmul.f32 %v462, %v520
        %v522 = vsub.f32 1.0, %v521
        %v523 = vmul.f32 %v520, %v522
        %v524 = vadd.f32 %v520, %v523
        %vm525 = vweird.f32 %v462
        %vm526 = vweird.f32 %v520
        %vm527 = vmor %vm525, %vm526
        %v528 = vsel %vm527, %v520, %v524
        %v529 = vand.u32 2147483647, %v462
        %vm530 = vcmp.eq.f32.partialorder %v529, 8.507059e+37
        %v531 = vand.u32 %v462, 2147483648
        %v532 = vor.u32 1.1754944e-38, %v531
        %v533 = vsel %vm530, %v532, %v528
        %v534 = vmul.f32 %v446, %v533
        %v535 = vrcp.pop %v463
        %v536 = vmul.f32 %v463, %v535
        %v537 = vsub.f32 1.0, %v536
        %v538 = vmul.f32 %v535, %v537
        %v539 = vadd.f32 %v535, %v538
        %vm540 = vweird.f32 %v463
        %vm541 = vweird.f32 %v535
        %vm542 = vmor %vm540, %vm541
        %v543 = vsel %vm542, %v535, %v539
        %v544 = vand.u32 2147483647, %v463
        %vm545 = vcmp.eq.f32.partialorder %v544, 8.507059e+37
        %v546 = vand.u32 %v463, 2147483648
        %v547 = vor.u32 1.1754944e-38, %v546
        %v548 = vsel %vm545, %v547, %v543
        %v549 = vmul.f32 %v447, %v548
        %v550 = vrcp.pop %v464
        %v551 = vmul.f32 %v464, %v550
        %v552 = vsub.f32 1.0, %v551
        %v553 = vmul.f32 %v550, %v552
        %v554 = vadd.f32 %v550, %v553
        %vm555 = vweird.f32 %v464
        %vm556 = vweird.f32 %v550
        %vm557 = vmor %vm555, %vm556
        %v558 = vsel %vm557, %v550, %v554
        %v559 = vand.u32 2147483647, %v464
        %vm560 = vcmp.eq.f32.partialorder %v559, 8.507059e+37
        %v561 = vand.u32 %v464, 2147483648
        %v562 = vor.u32 1.1754944e-38, %v561
        %v563 = vsel %vm560, %v562, %v558
        %v564 = vmul.f32 %v448, %v563
        %v565 = vrcp.pop %v465
        %v566 = vmul.f32 %v465, %v565
        %v567 = vsub.f32 1.0, %v566
        %v568 = vmul.f32 %v565, %v567
        %v569 = vadd.f32 %v565, %v568
        %vm570 = vweird.f32 %v465
        %vm571 = vweird.f32 %v565
        %vm572 = vmor %vm570, %vm571
        %v573 = vsel %vm572, %v565, %v569
        %v574 = vand.u32 2147483647, %v465
        %vm575 = vcmp.eq.f32.partialorder %v574, 8.507059e+37
        %v576 = vand.u32 %v465, 2147483648
        %v577 = vor.u32 1.1754944e-38, %v576
        %v578 = vsel %vm575, %v577, %v573
        %v579 = vmul.f32 %v449, %v578
        %v580 = vrcp.pop %v466
        %v581 = vmul.f32 %v466, %v580
        %v582 = vsub.f32 1.0, %v581
        %v583 = vmul.f32 %v580, %v582
        %v584 = vadd.f32 %v580, %v583
        %vm585 = vweird.f32 %v466
        %vm586 = vweird.f32 %v580
        %vm587 = vmor %vm585, %vm586
        %v588 = vsel %vm587, %v580, %v584
        %v589 = vand.u32 2147483647, %v466
        %vm590 = vcmp.eq.f32.partialorder %v589, 8.507059e+37
        %v591 = vand.u32 %v466, 2147483648
        %v592 = vor.u32 1.1754944e-38, %v591
        %v593 = vsel %vm590, %v592, %v588
        %v594 = vmul.f32 %v450, %v593
        %v595 = vrcp.pop %v467
        %v596 = vmul.f32 %v467, %v595
        %v597 = vsub.f32 1.0, %v596
        %v598 = vmul.f32 %v595, %v597
        %v599 = vadd.f32 %v595, %v598
        %vm600 = vweird.f32 %v467
        %vm601 = vweird.f32 %v595
        %vm602 = vmor %vm600, %vm601
        %v603 = vsel %vm602, %v595, %v599
        %v604 = vand.u32 2147483647, %v467
        %vm605 = vcmp.eq.f32.partialorder %v604, 8.507059e+37
        %v606 = vand.u32 %v467, 2147483648
        %v607 = vor.u32 1.1754944e-38, %v606
        %v608 = vsel %vm605, %v607, %v603
        %v609 = vmul.f32 %v451, %v608
        %v610 = vrcp.pop %v468
        %v611 = vmul.f32 %v468, %v610
        %v612 = vsub.f32 1.0, %v611
        %v613 = vmul.f32 %v610, %v612
        %v614 = vadd.f32 %v610, %v613
        %vm615 = vweird.f32 %v468
        %vm616 = vweird.f32 %v610
        %vm617 = vmor %vm615, %vm616
        %v618 = vsel %vm617, %v610, %v614
        %v619 = vand.u32 2147483647, %v468
        %vm620 = vcmp.eq.f32.partialorder %v619, 8.507059e+37
        %v621 = vand.u32 %v468, 2147483648
        %v622 = vor.u32 1.1754944e-38, %v621
        %v623 = vsel %vm620, %v622, %v618
        %v624 = vmul.f32 %v452, %v623
        %v625 = vrcp.pop %v469
        %v626 = vmul.f32 %v469, %v625
        %v627 = vsub.f32 1.0, %v626
        %v628 = vmul.f32 %v625, %v627
        %v629 = vadd.f32 %v625, %v628
        %vm630 = vweird.f32 %v469
        %vm631 = vweird.f32 %v625
        %vm632 = vmor %vm630, %vm631
        %v633 = vsel %vm632, %v625, %v629
        %v634 = vand.u32 2147483647, %v469
        %vm635 = vcmp.eq.f32.partialorder %v634, 8.507059e+37
        %v636 = vand.u32 %v469, 2147483648
        %v637 = vor.u32 1.1754944e-38, %v636
        %v638 = vsel %vm635, %v637, %v633
        %v639 = vmul.f32 %v453, %v638
        %v640 = vrcp.pop %v470
        %v641 = vmul.f32 %v470, %v640
        %v642 = vsub.f32 1.0, %v641
        %v643 = vmul.f32 %v640, %v642
        %v644 = vadd.f32 %v640, %v643
        %vm645 = vweird.f32 %v470
        %vm646 = vweird.f32 %v640
        %vm647 = vmor %vm645, %vm646
        %v648 = vsel %vm647, %v640, %v644
        %v649 = vand.u32 2147483647, %v470
        %vm650 = vcmp.eq.f32.partialorder %v649, 8.507059e+37
        %v651 = vand.u32 %v470, 2147483648
        %v652 = vor.u32 1.1754944e-38, %v651
        %v653 = vsel %vm650, %v652, %v648
        %v654 = vmul.f32 %v454, %v653
        %v655 = vrcp.pop %v471
        %v656 = vmul.f32 %v471, %v655
        %v657 = vsub.f32 1.0, %v656
        %v658 = vmul.f32 %v655, %v657
        %v659 = vadd.f32 %v655, %v658
        %vm660 = vweird.f32 %v471
        %vm661 = vweird.f32 %v655
        %vm662 = vmor %vm660, %vm661
        %v663 = vsel %vm662, %v655, %v659
        %v664 = vand.u32 2147483647, %v471
        %vm665 = vcmp.eq.f32.partialorder %v664, 8.507059e+37
        %v666 = vand.u32 %v471, 2147483648
        %v667 = vor.u32 1.1754944e-38, %v666
        %v668 = vsel %vm665, %v667, %v663
        %v669 = vmul.f32 %v455, %v668
        %v670 = vrcp.pop %v472
        %v671 = vmul.f32 %v472, %v670
        %v672 = vsub.f32 1.0, %v671
        %v673 = vmul.f32 %v670, %v672
        %v674 = vadd.f32 %v670, %v673
        %vm675 = vweird.f32 %v472
        %vm676 = vweird.f32 %v670
        %vm677 = vmor %vm675, %vm676
        %v678 = vsel %vm677, %v670, %v674
        %v679 = vand.u32 2147483647, %v472
        %vm680 = vcmp.eq.f32.partialorder %v679, 8.507059e+37
        %v681 = vand.u32 %v472, 2147483648
        %v682 = vor.u32 1.1754944e-38, %v681
        %v683 = vsel %vm680, %v682, %v678
        %v684 = vmul.f32 %v456, %v683
        %v685 = vrcp.pop %v473
        %v686 = vmul.f32 %v473, %v685
        %v687 = vsub.f32 1.0, %v686
        %v688 = vmul.f32 %v685, %v687
        %v689 = vadd.f32 %v685, %v688
        %vm690 = vweird.f32 %v473
        %vm691 = vweird.f32 %v685
        %vm692 = vmor %vm690, %vm691
        %v693 = vsel %vm692, %v685, %v689
        %v694 = vand.u32 2147483647, %v473
        %vm695 = vcmp.eq.f32.partialorder %v694, 8.507059e+37
        %v696 = vand.u32 %v473, 2147483648
        %v697 = vor.u32 1.1754944e-38, %v696
        %v698 = vsel %vm695, %v697, %v693
        %v699 = vmul.f32 %v457, %v698
        %v700 = vrcp.pop %v474
        %v701 = vmul.f32 %v474, %v700
        %v702 = vsub.f32 1.0, %v701
        %v703 = vmul.f32 %v700, %v702
        %v704 = vadd.f32 %v700, %v703
        %vm705 = vweird.f32 %v474
        %vm706 = vweird.f32 %v700
        %vm707 = vmor %vm705, %vm706
        %v708 = vsel %vm707, %v700, %v704
        %v709 = vand.u32 2147483647, %v474
        %vm710 = vcmp.eq.f32.partialorder %v709, 8.507059e+37
        %v711 = vand.u32 %v474, 2147483648
        %v712 = vor.u32 1.1754944e-38, %v711
        %v713 = vsel %vm710, %v712, %v708
        %v714 = vmul.f32 %v458, %v713
        %v715 = vlog2.pop %v489
        %v716 = vmul.f32 %v715, 0.6931472
        %v717 = vlog2.pop %v504
        %v718 = vmul.f32 %v717, 0.6931472
        %v719 = vlog2.pop %v519
        %v720 = vmul.f32 %v719, 0.6931472
        %v721 = vlog2.pop %v534
        %v722 = vmul.f32 %v721, 0.6931472
        %v723 = vlog2.pop %v549
        %v724 = vmul.f32 %v723, 0.6931472
        %v725 = vlog2.pop %v564
        %v726 = vmul.f32 %v725, 0.6931472
        %v727 = vlog2.pop %v579
        %v728 = vmul.f32 %v727, 0.6931472
        %v729 = vlog2.pop %v594
        %v730 = vmul.f32 %v729, 0.6931472
        %v731 = vlog2.pop %v609
        %v732 = vmul.f32 %v731, 0.6931472
        %v733 = vlog2.pop %v624
        %v734 = vmul.f32 %v733, 0.6931472
        %v735 = vlog2.pop %v639
        %v736 = vmul.f32 %v735, 0.6931472
        %v737 = vlog2.pop %v654
        %v738 = vmul.f32 %v737, 0.6931472
        %v739 = vlog2.pop %v669
        %v740 = vmul.f32 %v739, 0.6931472
        %v741 = vlog2.pop %v684
        %v742 = vmul.f32 %v741, 0.6931472
        %v743 = vlog2.pop %v699
        %v744 = vmul.f32 %v743, 0.6931472
        %v745 = vlog2.pop %v714
        %v746 = vmul.f32 %v745, 0.6931472
        %v747 = vmul.f32 %v716, 0.5
        %v748 = vmul.f32 %v718, 0.5
        %v749 = vmul.f32 %v720, 0.5
        %v750 = vmul.f32 %v722, 0.5
        %v751 = vmul.f32 %v724, 0.5
        %v752 = vmul.f32 %v726, 0.5
        %v753 = vmul.f32 %v728, 0.5
        %v754 = vmul.f32 %v730, 0.5
        %v755 = vmul.f32 %v732, 0.5
        %v756 = vmul.f32 %v734, 0.5
        %v757 = vmul.f32 %v736, 0.5
        %v758 = vmul.f32 %v738, 0.5
        %v759 = vmul.f32 %v740, 0.5
        %v760 = vmul.f32 %v742, 0.5
        %v761 = vmul.f32 %v744, 0.5
        %v762 = vmul.f32 %v746, 0.5
        %v763 = vrcp.pop %v395
        %v764 = vmul.f32 %v395, %v763
        %v765 = vsub.f32 1.0, %v764
        %v766 = vmul.f32 %v763, %v765
        %v767 = vadd.f32 %v763, %v766
        %vm768 = vweird.f32 %v395
        %vm769 = vweird.f32 %v763
        %vm770 = vmor %vm768, %vm769
        %v771 = vsel %vm770, %v763, %v767
        %v772 = vand.u32 2147483647, %v395
        %vm773 = vcmp.eq.f32.partialorder %v772, 8.507059e+37
        %v774 = vand.u32 %v395, 2147483648
        %v775 = vor.u32 1.1754944e-38, %v774
        %v776 = vsel %vm773, %v775, %v771
        %v777 = vmul.f32 %v747, %v776
        %v778 = vrcp.pop %v396
        %v779 = vmul.f32 %v396, %v778
        %v780 = vsub.f32 1.0, %v779
        %v781 = vmul.f32 %v778, %v780
        %v782 = vadd.f32 %v778, %v781
        %vm783 = vweird.f32 %v396
        %vm784 = vweird.f32 %v778
        %vm785 = vmor %vm783, %vm784
        %v786 = vsel %vm785, %v778, %v782
        %v787 = vand.u32 2147483647, %v396
        %vm788 = vcmp.eq.f32.partialorder %v787, 8.507059e+37
        %v789 = vand.u32 %v396, 2147483648
        %v790 = vor.u32 1.1754944e-38, %v789
        %v791 = vsel %vm788, %v790, %v786
        %v792 = vmul.f32 %v748, %v791
        %v793 = vrcp.pop %v397
        %v794 = vmul.f32 %v397, %v793
        %v795 = vsub.f32 1.0, %v794
        %v796 = vmul.f32 %v793, %v795
        %v797 = vadd.f32 %v793, %v796
        %vm798 = vweird.f32 %v397
        %vm799 = vweird.f32 %v793
        %vm800 = vmor %vm798, %vm799
        %v801 = vsel %vm800, %v793, %v797
        %v802 = vand.u32 2147483647, %v397
        %vm803 = vcmp.eq.f32.partialorder %v802, 8.507059e+37
        %v804 = vand.u32 %v397, 2147483648
        %v805 = vor.u32 1.1754944e-38, %v804
        %v806 = vsel %vm803, %v805, %v801
        %v807 = vmul.f32 %v749, %v806
        %v808 = vrcp.pop %v398
        %v809 = vmul.f32 %v398, %v808
        %v810 = vsub.f32 1.0, %v809
        %v811 = vmul.f32 %v808, %v810
        %v812 = vadd.f32 %v808, %v811
        %vm813 = vweird.f32 %v398
        %vm814 = vweird.f32 %v808
        %vm815 = vmor %vm813, %vm814
        %v816 = vsel %vm815, %v808, %v812
        %v817 = vand.u32 2147483647, %v398
        %vm818 = vcmp.eq.f32.partialorder %v817, 8.507059e+37
        %v819 = vand.u32 %v398, 2147483648
        %v820 = vor.u32 1.1754944e-38, %v819
        %v821 = vsel %vm818, %v820, %v816
        %v822 = vmul.f32 %v750, %v821
        %v823 = vrcp.pop %v399
        %v824 = vmul.f32 %v399, %v823
        %v825 = vsub.f32 1.0, %v824
        %v826 = vmul.f32 %v823, %v825
        %v827 = vadd.f32 %v823, %v826
        %vm828 = vweird.f32 %v399
        %vm829 = vweird.f32 %v823
        %vm830 = vmor %vm828, %vm829
        %v831 = vsel %vm830, %v823, %v827
        %v832 = vand.u32 2147483647, %v399
        %vm833 = vcmp.eq.f32.partialorder %v832, 8.507059e+37
        %v834 = vand.u32 %v399, 2147483648
        %v835 = vor.u32 1.1754944e-38, %v834
        %v836 = vsel %vm833, %v835, %v831
        %v837 = vmul.f32 %v751, %v836
        %v838 = vrcp.pop %v400
        %v839 = vmul.f32 %v400, %v838
        %v840 = vsub.f32 1.0, %v839
        %v841 = vmul.f32 %v838, %v840
        %v842 = vadd.f32 %v838, %v841
        %vm843 = vweird.f32 %v400
        %vm844 = vweird.f32 %v838
        %vm845 = vmor %vm843, %vm844
        %v846 = vsel %vm845, %v838, %v842
        %v847 = vand.u32 2147483647, %v400
        %vm848 = vcmp.eq.f32.partialorder %v847, 8.507059e+37
        %v849 = vand.u32 %v400, 2147483648
        %v850 = vor.u32 1.1754944e-38, %v849
        %v851 = vsel %vm848, %v850, %v846
        %v852 = vmul.f32 %v752, %v851
        %v853 = vrcp.pop %v401
        %v854 = vmul.f32 %v401, %v853
        %v855 = vsub.f32 1.0, %v854
        %v856 = vmul.f32 %v853, %v855
        %v857 = vadd.f32 %v853, %v856
        %vm858 = vweird.f32 %v401
        %vm859 = vweird.f32 %v853
        %vm860 = vmor %vm858, %vm859
        %v861 = vsel %vm860, %v853, %v857
        %v862 = vand.u32 2147483647, %v401
        %vm863 = vcmp.eq.f32.partialorder %v862, 8.507059e+37
        %v864 = vand.u32 %v401, 2147483648
        %v865 = vor.u32 1.1754944e-38, %v864
        %v866 = vsel %vm863, %v865, %v861
        %v867 = vmul.f32 %v753, %v866
        %v868 = vrcp.pop %v402
        %v869 = vmul.f32 %v402, %v868
        %v870 = vsub.f32 1.0, %v869
        %v871 = vmul.f32 %v868, %v870
        %v872 = vadd.f32 %v868, %v871
        %vm873 = vweird.f32 %v402
        %vm874 = vweird.f32 %v868
        %vm875 = vmor %vm873, %vm874
        %v876 = vsel %vm875, %v868, %v872
        %v877 = vand.u32 2147483647, %v402
        %vm878 = vcmp.eq.f32.partialorder %v877, 8.507059e+37
        %v879 = vand.u32 %v402, 2147483648
        %v880 = vor.u32 1.1754944e-38, %v879
        %v881 = vsel %vm878, %v880, %v876
        %v882 = vmul.f32 %v754, %v881
        %v883 = vrcp.pop %v403
        %v884 = vmul.f32 %v403, %v883
        %v885 = vsub.f32 1.0, %v884
        %v886 = vmul.f32 %v883, %v885
        %v887 = vadd.f32 %v883, %v886
        %vm888 = vweird.f32 %v403
        %vm889 = vweird.f32 %v883
        %vm890 = vmor %vm888, %vm889
        %v891 = vsel %vm890, %v883, %v887
        %v892 = vand.u32 2147483647, %v403
        %vm893 = vcmp.eq.f32.partialorder %v892, 8.507059e+37
        %v894 = vand.u32 %v403, 2147483648
        %v895 = vor.u32 1.1754944e-38, %v894
        %v896 = vsel %vm893, %v895, %v891
        %v897 = vmul.f32 %v755, %v896
        %v898 = vrcp.pop %v404
        %v899 = vmul.f32 %v404, %v898
        %v900 = vsub.f32 1.0, %v899
        %v901 = vmul.f32 %v898, %v900
        %v902 = vadd.f32 %v898, %v901
        %vm903 = vweird.f32 %v404
        %vm904 = vweird.f32 %v898
        %vm905 = vmor %vm903, %vm904
        %v906 = vsel %vm905, %v898, %v902
        %v907 = vand.u32 2147483647, %v404
        %vm908 = vcmp.eq.f32.partialorder %v907, 8.507059e+37
        %v909 = vand.u32 %v404, 2147483648
        %v910 = vor.u32 1.1754944e-38, %v909
        %v911 = vsel %vm908, %v910, %v906
        %v912 = vmul.f32 %v756, %v911
        %v913 = vrcp.pop %v405
        %v914 = vmul.f32 %v405, %v913
        %v915 = vsub.f32 1.0, %v914
        %v916 = vmul.f32 %v913, %v915
        %v917 = vadd.f32 %v913, %v916
        %vm918 = vweird.f32 %v405
        %vm919 = vweird.f32 %v913
        %vm920 = vmor %vm918, %vm919
        %v921 = vsel %vm920, %v913, %v917
        %v922 = vand.u32 2147483647, %v405
        %vm923 = vcmp.eq.f32.partialorder %v922, 8.507059e+37
        %v924 = vand.u32 %v405, 2147483648
        %v925 = vor.u32 1.1754944e-38, %v924
        %v926 = vsel %vm923, %v925, %v921
        %v927 = vmul.f32 %v757, %v926
        %v928 = vrcp.pop %v406
        %v929 = vmul.f32 %v406, %v928
        %v930 = vsub.f32 1.0, %v929
        %v931 = vmul.f32 %v928, %v930
        %v932 = vadd.f32 %v928, %v931
        %vm933 = vweird.f32 %v406
        %vm934 = vweird.f32 %v928
        %vm935 = vmor %vm933, %vm934
        %v936 = vsel %vm935, %v928, %v932
        %v937 = vand.u32 2147483647, %v406
        %vm938 = vcmp.eq.f32.partialorder %v937, 8.507059e+37
        %v939 = vand.u32 %v406, 2147483648
        %v940 = vor.u32 1.1754944e-38, %v939
        %v941 = vsel %vm938, %v940, %v936
        %v942 = vmul.f32 %v758, %v941
        %v943 = vrcp.pop %v407
        %v944 = vmul.f32 %v407, %v943
        %v945 = vsub.f32 1.0, %v944
        %v946 = vmul.f32 %v943, %v945
        %v947 = vadd.f32 %v943, %v946
        %vm948 = vweird.f32 %v407
        %vm949 = vweird.f32 %v943
        %vm950 = vmor %vm948, %vm949
        %v951 = vsel %vm950, %v943, %v947
        %v952 = vand.u32 2147483647, %v407
        %vm953 = vcmp.eq.f32.partialorder %v952, 8.507059e+37
        %v954 = vand.u32 %v407, 2147483648
        %v955 = vor.u32 1.1754944e-38, %v954
        %v956 = vsel %vm953, %v955, %v951
        %v957 = vmul.f32 %v759, %v956
        %v958 = vrcp.pop %v408
        %v959 = vmul.f32 %v408, %v958
        %v960 = vsub.f32 1.0, %v959
        %v961 = vmul.f32 %v958, %v960
        %v962 = vadd.f32 %v958, %v961
        %vm963 = vweird.f32 %v408
        %vm964 = vweird.f32 %v958
        %vm965 = vmor %vm963, %vm964
        %v966 = vsel %vm965, %v958, %v962
        %v967 = vand.u32 2147483647, %v408
        %vm968 = vcmp.eq.f32.partialorder %v967, 8.507059e+37
        %v969 = vand.u32 %v408, 2147483648
        %v970 = vor.u32 1.1754944e-38, %v969
        %v971 = vsel %vm968, %v970, %v966
        %v972 = vmul.f32 %v760, %v971
        %v973 = vrcp.pop %v409
        %v974 = vmul.f32 %v409, %v973
        %v975 = vsub.f32 1.0, %v974
        %v976 = vmul.f32 %v973, %v975
        %v977 = vadd.f32 %v973, %v976
        %vm978 = vweird.f32 %v409
        %vm979 = vweird.f32 %v973
        %vm980 = vmor %vm978, %vm979
        %v981 = vsel %vm980, %v973, %v977
        %v982 = vand.u32 2147483647, %v409
        %vm983 = vcmp.eq.f32.partialorder %v982, 8.507059e+37
        %v984 = vand.u32 %v409, 2147483648
        %v985 = vor.u32 1.1754944e-38, %v984
        %v986 = vsel %vm983, %v985, %v981
        %v987 = vmul.f32 %v761, %v986
        %v988 = vrcp.pop %v410
        %v989 = vmul.f32 %v410, %v988
        %v990 = vsub.f32 1.0, %v989
        %v991 = vmul.f32 %v988, %v990
        %v992 = vadd.f32 %v988, %v991
        %vm993 = vweird.f32 %v410
        %vm994 = vweird.f32 %v988
        %vm995 = vmor %vm993, %vm994
        %v996 = vsel %vm995, %v988, %v992
        %v997 = vand.u32 2147483647, %v410
        %vm998 = vcmp.eq.f32.partialorder %v997, 8.507059e+37
        %v999 = vand.u32 %v410, 2147483648
        %v1000 = vor.u32 1.1754944e-38, %v999
        %v1001 = vsel %vm998, %v1000, %v996
        %v1002 = vmul.f32 %v762, %v1001
        %v1003 = vmul.f32 %v777, %v139
        %v1004 = vmul.f32 %v792, %v140
        %v1005 = vmul.f32 %v807, %v141
        %v1006 = vmul.f32 %v822, %v142
        %v1007 = vmul.f32 %v837, %v143
        %v1008 = vmul.f32 %v852, %v144
        %v1009 = vmul.f32 %v867, %v145
        %v1010 = vmul.f32 %v882, %v146
        %v1011 = vmul.f32 %v897, %v147
        %v1012 = vmul.f32 %v912, %v148
        %v1013 = vmul.f32 %v927, %v149
        %v1014 = vmul.f32 %v942, %v150
        %v1015 = vmul.f32 %v957, %v151
        %v1016 = vmul.f32 %v972, %v152
        %v1017 = vmul.f32 %v987, %v153
        %v1018 = vmul.f32 %v1002, %v154
        %v1019 = vpack.c.bf16 %v1003, %v1003
        %v1020 = vpack.c.bf16 %v1004, %v1004
        %v1021 = vpack.c.bf16 %v1005, %v1005
        %v1022 = vpack.c.bf16 %v1006, %v1006
        %v1023 = vpack.c.bf16 %v1007, %v1007
        %v1024 = vpack.c.bf16 %v1008, %v1008
        %v1025 = vpack.c.bf16 %v1009, %v1009
        %v1026 = vpack.c.bf16 %v1010, %v1010
        %v1027 = vpack.c.bf16 %v1011, %v1011
        %v1028 = vpack.c.bf16 %v1012, %v1012
        %v1029 = vpack.c.bf16 %v1013, %v1013
        %v1030 = vpack.c.bf16 %v1014, %v1014
        %v1031 = vpack.c.bf16 %v1015, %v1015
        %v1032 = vpack.c.bf16 %v1016, %v1016
        %v1033 = vpack.c.bf16 %v1017, %v1017
        %v1034 = vpack.c.bf16 %v1018, %v1018
        %1035 = vst [vmem:[%s136] sm:$0xf] %v1019
        %1036 = vst [vmem:[%s136 + $0x4] sm:$0xf] %v1020
        %1037 = vst [vmem:[%s136 + $0x8] sm:$0xf] %v1021
        %1038 = vst [vmem:[%s136 + $0xc] sm:$0xf] %v1022
        %1039 = vst [vmem:[%s136 + $0x10] sm:$0xf] %v1023
        %1040 = vst [vmem:[%s136 + $0x14] sm:$0xf] %v1024
        %1041 = vst [vmem:[%s136 + $0x18] sm:$0xf] %v1025
        %1042 = vst [vmem:[%s136 + $0x1c] sm:$0xf] %v1026
        %1043 = vst [vmem:[%s136 + $0x20] sm:$0xf] %v1027
        %1044 = vst [vmem:[%s136 + $0x24] sm:$0xf] %v1028
        %1045 = vst [vmem:[%s136 + $0x28] sm:$0xf] %v1029
        %1046 = vst [vmem:[%s136 + $0x2c] sm:$0xf] %v1030
        %1047 = vst [vmem:[%s136 + $0x30] sm:$0xf] %v1031
        %1048 = vst [vmem:[%s136 + $0x34] sm:$0xf] %v1032
        %1049 = vst [vmem:[%s136 + $0x38] sm:$0xf] %v1033
        %1050 = vst [vmem:[%s136 + $0x3c] sm:$0xf] %v1034
        %s1051 = sand.u32 %s52, 1
        %s1052 = scalar_lea.sflag [#allocation4], %s1051
        %s1053 = sand.u32 %s52, 1
        %s1054 = smul.addr %s1053, 64
        %s1055 = scalar_lea.vmem [#allocation5], %s1054
        // Predicated region
        $region29: #{tpu_custom_call.1} parent=23 // pred_check
          %p1056 = pneg %p62
        $region30: #{tpu_custom_call.1} parent=23 // pred_check_branch
          %1058 = sbr.rel (%p1056) target = $region32
        $region31: #{tpu_custom_call.1} parent=23 // pred_region
          %s1059 = smul.u32 16, %s18
          %1061 = vsyncadd %s1052, 0
          %s1062 = smul.addr %s1059, 4
          %s1063 = scalar_lea.hbm %s1, %s1062
          %s1064 = sshll.u32 %s1055, 4
          %s1065 = int_to_ptr.vmem [resolvable:$true] %s1064
          %s1066 = sshll.u32 %s1063, 4
          %s1067 = int_to_ptr.hbm [resolvable:$true] %s1066
          %1072 = dma.vmem_to_hbm [thread:$0]  %s1065, 1024, %s1067, %s1052, 64, 64, 4
        $region32: #{tpu_custom_call.1} parent=23 // pred_fallthru
          _
      $region24: #{tpu_custom_call.1} parent=5 // pred_fallthru
        _
      %p1073 = scmp.le.s32.totalorder 2, %s13
      // Predicated region
      $region33: #{tpu_custom_call.1} parent=5 // pred_check
        %p1074 = pneg %p1073
      $region34: #{tpu_custom_call.1} parent=5 // pred_check_branch
        %1076 = sbr.rel (%p1074) target = $region36
      $region35: #{tpu_custom_call.1} parent=5 // pred_region
        %s1077 = ssub.s32 %s13, 2
        // Predicated region
        $region37: #{tpu_custom_call.1} parent=35 // pred_check
          %p1078 = pneg %p68
        $region38: #{tpu_custom_call.1} parent=35 // pred_check_branch
          %1080 = sbr.rel (%p1078) target = $region40
        $region39: #{tpu_custom_call.1} parent=35 // pred_region
          %s1081 = sand.u32 %s53, 1
          %s1082 = scalar_lea.sflag [#allocation4], %s1081
          %s1083 = sand.u32 %s53, 1
          %s1084 = smul.addr %s1083, 64
          %s1085 = scalar_lea.vmem [#allocation5], %s1084
          %1087 = dma.done %s1082, 1024
        $region40: #{tpu_custom_call.1} parent=35 // pred_fallthru
          _
      $region36: #{tpu_custom_call.1} parent=5 // pred_fallthru
        _
    $region6: #{tpu_custom_call.1} parent=1 // loop_footer
      %s17 = sadd.s32 1, %s13
    $region7: #{tpu_custom_call.1} parent=1 // loop_footer_branch
      %12 = sbr.rel target = $region3
    $region8: #{tpu_custom_call.1} parent=1 // loop_exit
      _
    %1088 = vsyncpa [#allocation3], 1
    %s1089 = scalar_lea.sflag [#allocation3], 1
    %1090 = vsyncpa %s1089, 1
    %1091 = vsyncpa [#allocation4], 1
    %s1092 = scalar_lea.sflag [#allocation4], 1
    %1093 = vsyncpa %s1092, 1

</llo_original>
